<compile_context>
chip_gen: v5e
topology: v5e:2x2
jax: 0.10.0
libtpu: 0.0.40
codegen_flags: <defaults>
</compile_context>

<pallas_src>
import functools

import jax
import jax.numpy as jnp
from jax.experimental import pallas as pl
from jax.experimental.pallas import tpu as pltpu


def _label_smoothing_kernel(x_ref, t_ref, out_ref, *, confidence, smoothing,
                            inv_c, total_rows, tile_b):
    i = pl.program_id(0)

    x = x_ref[...].astype(jnp.float32)   # (TB, C)
    t = t_ref[...].astype(jnp.float32)   # (TB, C)

    # Numerically-stable log-normalizer along the class (lane) axis.
    m = jnp.max(x, axis=-1, keepdims=True)                          # (TB, 1)
    lse = jnp.log(jnp.sum(jnp.exp(x - m), axis=-1, keepdims=True))  # (TB, 1)
    logz = m + lse                                                  # (TB, 1)

    # Single fused weighted reduction:
    #   loss_row = sum_c[ -logprob_c * (conf*t_c + smoothing/C) ]
    #            = sum_c[ (logz - x_c) * w_c ]
    w = confidence * t + (smoothing * inv_c)                        # (TB, C)
    loss = jnp.sum(w * (logz - x), axis=-1, keepdims=True)          # (TB, 1)

    # Mask OOB rows of a (possibly partial) last tile.  jnp.where is a select,
    # so garbage / inf / NaN in the undefined padded rows never propagates.
    row = i * tile_b + jax.lax.broadcasted_iota(jnp.int32, (tile_b, 1), 0)
    loss = jnp.where(row < total_rows, loss, 0.0)

    # Scalar per-tile partial sum -> SMEM output block.
    out_ref[0, 0] = jnp.sum(loss)


def _vmem_capacity_bytes():
    try:
        return int(pltpu.get_tpu_info().vmem_capacity_bytes)
    except Exception:
        # Conservative fallback = smallest per-TensorCore VMEM (v7x, 64 MiB).
        return 64 * 1024 * 1024


def _choose_tile_b(batch, num_classes, itemsize, vmem_cap):
    """Largest row tile whose 2-input x 2-buffer working set fits the budget."""
    budget = (vmem_cap * 3) // 8          # ~24 MiB on v7x, ~48 MiB on v5e/v6e
    bytes_per_row = 4 * num_classes * itemsize   # 2 inputs x 2 pipeline bufs
    max_rows = max(16, int(budget // bytes_per_row))
    tile_b = max(16, (max_rows // 16) * 16)      # mult. of 16: f32 & bf16 ok

    # Keep >= ~8 grid steps on big batches (megacore sharding + pipeline
    # depth), but never drop below 512 rows/step (per-step overhead).
    rows_for_8_tiles = (((batch + 7) // 8 + 15) // 16) * 16
    tile_b = min(tile_b, max(512, rows_for_8_tiles))

    # Never bigger than the (16-rounded) batch itself.
    tile_b = min(tile_b, max(16, ((batch + 15) // 16) * 16))
    return max(16, tile_b)


def label_smoothing_loss(x, target, smoothing=0.1, tile_b=None):
    """Training-mode LabelSmoothing forward. x, target: (N, C) (f32 or bf16)."""
    B, C = x.shape
    itemsize = jnp.dtype(x.dtype).itemsize
    vmem_cap = _vmem_capacity_bytes()
    if tile_b is None:
        tile_b = _choose_tile_b(B, C, itemsize, vmem_cap)

    # No padding: the last block may be partial; the kernel masks OOB rows.
    num_tiles = pl.cdiv(B, tile_b)

    # Raise the scoped VMEM limit to cover the double-buffered inputs plus
    # headroom for f32 temporaries, capped well below physical VMEM.
    working_set = 4 * tile_b * C * itemsize
    vmem_limit = int(min(vmem_cap * 3 // 4,
                         max(2 * working_set, 32 * 1024 * 1024)))

    kernel = functools.partial(
        _label_smoothing_kernel,
        confidence=1.0 - smoothing,
        smoothing=smoothing,
        inv_c=1.0 / C,
        total_rows=B,
        tile_b=tile_b,
    )
    partials = pl.pallas_call(
        kernel,
        out_shape=jax.ShapeDtypeStruct((num_tiles, 1), jnp.float32),
        grid_spec=pltpu.PrefetchScalarGridSpec(
            num_scalar_prefetch=0,
            grid=(num_tiles,),
            in_specs=[
                pl.BlockSpec((tile_b, C), lambda i: (i, 0)),
                pl.BlockSpec((tile_b, C), lambda i: (i, 0)),
            ],
            out_specs=pl.BlockSpec((1, 1), lambda i: (i, 0),
                                   memory_space=pltpu.MemorySpace.SMEM),
        ),
        compiler_params=pltpu.CompilerParams(
            dimension_semantics=("parallel",),
            vmem_limit_bytes=vmem_limit),
    )(x, target)
    return jnp.sum(partials) / B


def _reference(x, target, smoothing):
    logprobs = jax.nn.log_softmax(x.astype(jnp.float32), axis=-1)
    nll = jnp.sum(-logprobs * target.astype(jnp.float32), axis=-1)
    smooth = jnp.mean(-logprobs, axis=-1)
    return jnp.mean((1.0 - smoothing) * nll + smoothing * smooth)


if __name__ == "__main__":
    smoothing = 0.1
    key = jax.random.PRNGKey(0)

    def make_case(k, B, C):
        kx, kl = jax.random.split(k)
        x = jax.random.normal(kx, (B, C), dtype=jnp.float32)
        labels = jax.random.randint(kl, (B,), 0, C)
        target = jax.nn.one_hot(labels, C, dtype=jnp.float32)
        return x, target

    k1, k2, k3 = jax.random.split(key, 3)

    # Case 1: batch a multiple of the tile.
    x, t = make_case(k1, 16, 128)
    loss = label_smoothing_loss(x, t, smoothing=smoothing)
    jax.block_until_ready(loss)
    ref = _reference(x, t, smoothing)
    assert jnp.allclose(loss, ref, rtol=1e-5, atol=1e-5), (loss, ref)

    # Case 2: ragged batch, single partial tile (no-pad path + row masking).
    x2, t2 = make_case(k2, 10, 128)
    loss2 = label_smoothing_loss(x2, t2, smoothing=smoothing)
    jax.block_until_ready(loss2)
    ref2 = _reference(x2, t2, smoothing)
    assert jnp.allclose(loss2, ref2, rtol=1e-5, atol=1e-5), (loss2, ref2)

    # Case 3: multi-tile grid with a partial LAST tile (forced small tile_b).
    x3, t3 = make_case(k3, 40, 128)
    loss3 = label_smoothing_loss(x3, t3, smoothing=smoothing, tile_b=16)
    jax.block_until_ready(loss3)
    ref3 = _reference(x3, t3, smoothing)
    assert jnp.allclose(loss3, ref3, rtol=1e-5, atol=1e-5), (loss3, ref3)

    print("KERNEL_OK")
</pallas_src>

<mosaic_0001>
module attributes {stable_mosaic.version = 11 : i64} {
  func.func @_label_smoothing_kernel(%arg0: i32, %arg1: memref<16x128xf32, #tpu.memory_space<vmem>>, %arg2: memref<16x128xf32, #tpu.memory_space<vmem>>, %arg3: memref<1x1xf32, #tpu.memory_space<smem>>) attributes {dimension_semantics = [#tpu.dimension_semantics<parallel>], iteration_bounds = array<i64: 1>, scalar_prefetch = 0 : i64, scratch_operands = 0 : i64, tpu.core_type = #tpu.core_type<tc>, window_params = [{transform_indices = @transform_0, window_bounds = array<i64: 16, 128>}, {transform_indices = @transform_1, window_bounds = array<i64: 16, 128>}, {transform_indices = @transform_2, window_bounds = array<i64: 1, 1>}]} {
    %c0 = arith.constant 0 : index
    %c0_0 = arith.constant 0 : index
    %0 = vector.load %arg1[%c0, %c0_0] : memref<16x128xf32, #tpu.memory_space<vmem>>, vector<16x128xf32>
    %c0_1 = arith.constant 0 : index
    %c0_2 = arith.constant 0 : index
    %1 = vector.load %arg2[%c0_1, %c0_2] : memref<16x128xf32, #tpu.memory_space<vmem>>, vector<16x128xf32>
    %cst = arith.constant dense<0xFF800000> : vector<16xf32>
    %2 = vector.multi_reduction <maximumf>, %0, %cst [1] : vector<16x128xf32> to vector<16xf32>
    %3 = vector.shape_cast %2 : vector<16xf32> to vector<16x1xf32>
    %4 = vector.broadcast %3 : vector<16x1xf32> to vector<16x128xf32>
    %5 = arith.subf %0, %4 : vector<16x128xf32>
    %6 = math.exp %5 : vector<16x128xf32>
    %cst_3 = arith.constant dense<0.000000e+00> : vector<16xf32>
    %7 = vector.multi_reduction <add>, %6, %cst_3 [1] : vector<16x128xf32> to vector<16xf32>
    %8 = vector.shape_cast %7 : vector<16xf32> to vector<16x1xf32>
    %9 = math.log %8 : vector<16x1xf32>
    %10 = arith.addf %3, %9 : vector<16x1xf32>
    %cst_4 = arith.constant 0.899999976 : f32
    %11 = vector.broadcast %cst_4 : f32 to vector<16x128xf32>
    %12 = arith.mulf %11, %1 : vector<16x128xf32>
    %cst_5 = arith.constant 7.812500e-04 : f32
    %13 = vector.broadcast %cst_5 : f32 to vector<16x128xf32>
    %14 = arith.addf %12, %13 : vector<16x128xf32>
    %15 = vector.broadcast %10 : vector<16x1xf32> to vector<16x128xf32>
    %16 = arith.subf %15, %0 : vector<16x128xf32>
    %17 = arith.mulf %14, %16 : vector<16x128xf32>
    %cst_6 = arith.constant dense<0.000000e+00> : vector<16xf32>
    %18 = vector.multi_reduction <add>, %17, %cst_6 [1] : vector<16x128xf32> to vector<16xf32>
    %19 = vector.shape_cast %18 : vector<16xf32> to vector<16x1xf32>
    %c16_i32 = arith.constant 16 : i32
    %20 = arith.muli %arg0, %c16_i32 : i32
    %21 = tpu.iota {dimensions = array<i32: 0>} : vector<16x1xi32>
    %22 = vector.broadcast %20 : i32 to vector<16x1xi32>
    %23 = arith.addi %22, %21 : vector<16x1xi32>
    %c16_i32_7 = arith.constant 16 : i32
    %24 = vector.broadcast %c16_i32_7 : i32 to vector<16x1xi32>
    %25 = arith.cmpi slt, %23, %24 : vector<16x1xi32>
    %cst_8 = arith.constant 0.000000e+00 : f32
    %26 = vector.broadcast %cst_8 : f32 to vector<16x1xf32>
    %27 = arith.select %25, %19, %26 : vector<16x1xi1>, vector<16x1xf32>
    %28 = vector.shape_cast %27 : vector<16x1xf32> to vector<1x16x1xf32>
    %cst_9 = arith.constant dense<0.000000e+00> : vector<1xf32>
    %29 = vector.multi_reduction <add>, %28, %cst_9 [1, 2] : vector<1x16x1xf32> to vector<1xf32>
    %30 = vector.shape_cast %29 : vector<1xf32> to vector<1x1x1xf32>
    %31 = vector.extract %30[0, 0, 0] : f32 from vector<1x1x1xf32>
    %c0_10 = arith.constant 0 : index
    %c0_11 = arith.constant 0 : index
    %32 = memref.load %arg3[%c0_10, %c0_11] : memref<1x1xf32, #tpu.memory_space<smem>>
    memref.store %31, %arg3[%c0_10, %c0_11] : memref<1x1xf32, #tpu.memory_space<smem>>
    return
  }
  func.func @transform_0(%arg0: i32) -> (i32, i32) {
    %c0_i32 = arith.constant 0 : i32
    %c0_i32_0 = arith.constant 0 : i32
    return %arg0, %c0_i32 : i32, i32
  }
  func.func @transform_1(%arg0: i32) -> (i32, i32) {
    %c0_i32 = arith.constant 0 : i32
    %c0_i32_0 = arith.constant 0 : i32
    return %arg0, %c0_i32 : i32, i32
  }
  func.func @transform_2(%arg0: i32) -> (i32, i32) {
    %c0_i32 = arith.constant 0 : i32
    %c0_i32_0 = arith.constant 0 : i32
    return %arg0, %c0_i32 : i32, i32
  }
}

</mosaic_0001>

<llo_original>
// kernel: tpu_custom_call.1
$region0: #{tpu_custom_call.1}
  #allocation0 [shape = 'u32[]', space=smem, size = 0x4, offset = 0x4, fixed_abs, tag = 'smem constant byte address 0x4 - core index']
  #allocation1 [shape = 'u32[72,128]{1,0:T(1,128)}', space=vmem, size = 0x9000, scoped, tag = 'internal scratch']
  %s0 = inlined_call_operand.hbm [shape: f32[16,128], index: 0, kind: input, shape index: {}]
  %s1 = inlined_call_operand.hbm [shape: f32[16,128], index: 1, kind: input, shape index: {}]
  %s2 = inlined_call_operand.hbm [shape: f32[1,1], index: 2, kind: output, shape index: {}]
  %s3 = sld [smem:[#allocation0]]
  $region26: #{tpu_custom_call.1} parent=0
    _
  %s5 = ssub.s32 1, %s3
  %s6 = scalar_select 0, %s5, %s3
  $region1: #{tpu_custom_call.1} parent=0
    #allocation2 [shape = 'u8[8192]{0}', space=vmem, size = 0x2000, scoped, tag = 'input window, operand 0, single buffered']
    #allocation3 [shape = 's32[1]{0}', space=sflag, size = 0x4, scoped, tag = 'scoped memory for tpu_custom_call.1']
    #allocation4 [shape = 's32[1]{0}', space=sflag, size = 0x4, scoped, tag = 'scoped memory for tpu_custom_call.1']
    #allocation5 [shape = 'u8[8192]{0}', space=vmem, size = 0x2000, scoped, tag = 'input window, operand 1, single buffered']
    #allocation6 [shape = 's32[1]{0}', space=sflag, size = 0x4, scoped, tag = 'scoped memory for tpu_custom_call.1']
    #allocation7 [shape = 'u8[512]{0}', space=smem, size = 0x200, scoped, tag = 'output window, operand 0, single buffered']
    %7 = vsyncpa [#allocation3], 0
    %8 = vsyncpa [#allocation6], 0
    %9 = vsyncpa [#allocation4], 0
    // Predicated region
    $region2: #{tpu_custom_call.1} parent=1 // pred_check
      _
    $region3: #{tpu_custom_call.1} parent=1 // pred_check_branch
      %11 = sbr.rel (0) target = $region5
    $region4: #{tpu_custom_call.1} parent=1 // pred_region
      %13 = vsyncadd [#allocation3], 0
      %s14 = sshll.u32 %s0, 4
      %s15 = int_to_ptr.hbm [resolvable:$true] %s14
      %s16 = sshll.u32 [#allocation2], 4
      %s17 = int_to_ptr.vmem [resolvable:$true] %s16
      %22 = dma.hbm_to_vmem [thread:$0]  %s15, 256, %s17, [#allocation3], 128, 128, 8
    $region5: #{tpu_custom_call.1} parent=1 // pred_fallthru
      _
    // Predicated region
    $region6: #{tpu_custom_call.1} parent=1 // pred_check
      _
    $region7: #{tpu_custom_call.1} parent=1 // pred_check_branch
      %24 = sbr.rel (0) target = $region9
    $region8: #{tpu_custom_call.1} parent=1 // pred_region
      %26 = vsyncadd [#allocation6], 0
      %s27 = sshll.u32 %s1, 4
      %s28 = int_to_ptr.hbm [resolvable:$true] %s27
      %s29 = sshll.u32 [#allocation5], 4
      %s30 = int_to_ptr.vmem [resolvable:$true] %s29
      %35 = dma.hbm_to_vmem [thread:$0]  %s28, 256, %s30, [#allocation6], 128, 128, 8
    $region9: #{tpu_custom_call.1} parent=1 // pred_fallthru
      _
    // Predicated region
    $region10: #{tpu_custom_call.1} parent=1 // pred_check
      _
    $region11: #{tpu_custom_call.1} parent=1 // pred_check_branch
      %37 = sbr.rel (0) target = $region13
    $region12: #{tpu_custom_call.1} parent=1 // pred_region
      %39 = dma.done [#allocation3], 256
    $region13: #{tpu_custom_call.1} parent=1 // pred_fallthru
      _
    // Predicated region
    $region14: #{tpu_custom_call.1} parent=1 // pred_check
      _
    $region15: #{tpu_custom_call.1} parent=1 // pred_check_branch
      %41 = sbr.rel (0) target = $region17
    $region16: #{tpu_custom_call.1} parent=1 // pred_region
      %43 = dma.done [#allocation6], 256
    $region17: #{tpu_custom_call.1} parent=1 // pred_fallthru
      _
    %v44 = vld [vmem:[#allocation2] sm:$0xff]
    %v45 = vld [vmem:[#allocation2 + $0x8] sm:$0xff]
    %v46 = vld [vmem:[#allocation5] sm:$0xff]
    %v47 = vld [vmem:[#allocation5 + $0x8] sm:$0xff]
    %48 = vmax.xlane.f32.xlu0 %v44
    %v49 = vpop.xlane.xlu0 %48
    %50 = vmax.xlane.f32.xlu0 %v45
    %v51 = vpop.xlane.xlu0 %50
    %v52 = vsub.f32 %v44, %v49
    %v53 = vsub.f32 %v45, %v51
    %v54 = vmul.f32 %v52, 1.442695
    %v55 = vpow.pop %v54
    %v56 = vmul.f32 %v53, 1.442695
    %v57 = vpow.pop %v56
    %58 = vadd.xlane.f32.xlu0 %v55
    %v59 = vpop.xlane.xlu0 %58
    %60 = vadd.xlane.f32.xlu0 %v57
    %v61 = vpop.xlane.xlu0 %60
    %v62 = vlog2.pop %v59
    %v63 = vmul.f32 %v62, 0.6931472
    %v64 = vlog2.pop %v61
    %v65 = vmul.f32 %v64, 0.6931472
    %v66 = vadd.f32 %v49, %v63
    %v67 = vadd.f32 %v51, %v65
    %v68 = vmul.f32 %v46, 0.9
    %v69 = vmul.f32 %v47, 0.9
    %v70 = vadd.f32 %v68, 0.00078125
    %v71 = vadd.f32 %v69, 0.00078125
    %v72 = vsub.f32 %v66, %v44
    %v73 = vsub.f32 %v67, %v45
    %v74 = vmul.f32 %v70, %v72
    %v75 = vmul.f32 %v71, %v73
    %76 = vadd.xlane.f32.xlu0 %v74
    %v77 = vpop.xlane.xlu0 %76
    %78 = vadd.xlane.f32.xlu0 %v75
    %v79 = vpop.xlane.xlu0 %78
    %s80 = smul.u32 0, 16
    %v81 = vlaneseq
    %v82 = vshrl.u32 %v81, 7
    %v83 = vadd.s32 %v82, 8
    %v84 = vstv %s80
    %v85 = vadd.s32 %v84, %v82
    %v86 = vadd.s32 %v84, %v83
    %vm87 = vcmp.lt.s32.totalorder %v85, 16
    %vm88 = vcmp.lt.s32.totalorder %v86, 16
    %v89 = vsel %vm87, %v77, 0.0
    %v90 = vsel %vm88, %v79, 0.0
    %vm91 = vcmask 7168
    %v92 = vsel %vm91, %v89, 0.0
    %v93 = vsel %vm91, %v90, 0.0
    %v94 = vadd.f32 %v92, %v93
    %95 = vadd.xlane.f32.xlu0 %v94
    %v96 = vpop.xlane.xlu0 %95
    %v97 = vrot.slane %v96, 4
    %v98 = vadd.f32 %v96, %v97
    %v99 = vrot.slane %v98, 2
    %v100 = vadd.f32 %v98, %v99
    %v101 = vrot.slane %v100, 1
    %v102 = vadd.f32 %v100, %v101
    %s103 = vtos %v102
    %s104 = scalar_lea.smem [#allocation7], 0
    %105 = sst [smem:[%s104]] %s103
    // Predicated region
    $region18: #{tpu_custom_call.1} parent=1 // pred_check
      _
    $region19: #{tpu_custom_call.1} parent=1 // pred_check_branch
      %107 = sbr.rel (0) target = $region21
    $region20: #{tpu_custom_call.1} parent=1 // pred_region
      %109 = vsyncadd [#allocation4], 0
      %s111 = sshll.u32 %s2, 4
      %s112 = int_to_ptr.hbm [resolvable:$true] %s111
      %114 = dma.smem_to_hbm [#allocation7], 16, %s112, [#allocation4]
    $region21: #{tpu_custom_call.1} parent=1 // pred_fallthru
      _
    // Predicated region
    $region22: #{tpu_custom_call.1} parent=1 // pred_check
      _
    $region23: #{tpu_custom_call.1} parent=1 // pred_check_branch
      %116 = sbr.rel (0) target = $region25
    $region24: #{tpu_custom_call.1} parent=1 // pred_region
      %118 = dma.done [#allocation4], 16
    $region25: #{tpu_custom_call.1} parent=1 // pred_fallthru
      _
    %119 = sfence
    %120 = vsyncpa [#allocation3], 1
    %121 = vsyncpa [#allocation6], 1
    %122 = vsyncpa [#allocation4], 1

</llo_original>
